<compile_context>
chip_gen: v5e
topology: v5e:2x2
jax: 0.10.0
libtpu: 0.0.40
codegen_flags: <defaults>
</compile_context>

<pallas_src>
import functools

import numpy as np
import jax
import jax.numpy as jnp
from jax.experimental import pallas as pl
from jax.experimental.pallas import tpu as pltpu


# ---------------------------------------------------------------------------
# Small helpers
# ---------------------------------------------------------------------------
def _round_up(x: int, m: int) -> int:
    return (x + m - 1) // m * m


def _sublane_multiple(dtype) -> int:
    # Sub-32-bit dtypes pack along sublanes: 8 for 4-byte, 16 for 2-byte,
    # 32 for 1-byte element types.
    return max(8, 32 // jnp.dtype(dtype).itemsize)


def _vmem_caps():
    """(scoped vmem_limit_bytes, planning budget) from the chip's VMEM capacity."""
    try:
        cap = int(pltpu.get_tpu_info().vmem_capacity_bytes)  # 64 MiB v7x, 128 MiB v5e/v6e
    except Exception:
        cap = 64 * 1024 * 1024                               # conservative default
    return int(cap * 0.85), int(cap * 0.70)


def _layer_norm(z, gamma, beta, *, eps, d_in, d_pad):
    """LayerNorm over the last axis using the true feature count d_in.

    z may carry zero-padded lanes (d_pad > d_in); padded lanes contribute zero
    to the sums and are masked out of the variance, so numerics match an
    un-padded LayerNorm exactly.  gamma/beta are zero in the padded lanes.
    """
    inv_d = 1.0 / float(d_in)
    if d_pad == d_in:
        mean = jnp.mean(z, axis=-1, keepdims=True)
        zc = z - mean
        var = jnp.mean(zc * zc, axis=-1, keepdims=True)
    else:
        mean = jnp.sum(z, axis=-1, keepdims=True) * inv_d
        col = jax.lax.broadcasted_iota(jnp.int32, z.shape, z.ndim - 1)
        zc = jnp.where(col < d_in, z - mean, 0.0)
        var = jnp.sum(zc * zc, axis=-1, keepdims=True) * inv_d
    zn = (z - mean) * jax.lax.rsqrt(var + eps)
    return zn * gamma + beta


# ---------------------------------------------------------------------------
# Kernel 1: fully-resident weights (single fused body per row tile)
# ---------------------------------------------------------------------------
def _ffn_kernel_resident(x_ref, w1_ref, b1_ref, w2_ref, b2_ref, g_ref, be_ref,
                         o_ref, *, eps, d_in, d_pad):
    x = x_ref[...]                                              # (T, d_pad) native dtype

    # w_1 (+b1) + ReLU: native-dtype MXU matmul, f32 accumulation.
    h = jnp.dot(x, w1_ref[...], preferred_element_type=jnp.float32) + b1_ref[...]
    h = jnp.maximum(h, 0.0)                                     # (T, h_pad) f32

    # w_2 (+b2): cast h back to the input dtype to stay on the native MXU path.
    y = jnp.dot(h.astype(x.dtype), w2_ref[...],
                preferred_element_type=jnp.float32) + b2_ref[...]

    # TODO(synk): dropout is treated as identity (inference semantics); no RNG mask.
    z = y + x.astype(jnp.float32)                               # residual, f32
    o_ref[...] = _layer_norm(z, g_ref[...], be_ref[...],
                             eps=eps, d_in=d_in, d_pad=d_pad).astype(o_ref.dtype)


# ---------------------------------------------------------------------------
# Kernel 2: d_hid-tiled fallback (streamed weight slabs + f32 accumulator)
# ---------------------------------------------------------------------------
def _ffn_kernel_hid_tiled(x_ref, w1_ref, b1_ref, w2_ref, b2_ref, g_ref, be_ref,
                          o_ref, acc_ref, *, eps, d_in, d_pad):
    k = pl.program_id(1)

    @pl.when(k == 0)
    def _():
        acc_ref[...] = jnp.zeros_like(acc_ref)

    x = x_ref[...]                                              # (T, d_pad)
    h = jnp.dot(x, w1_ref[...], preferred_element_type=jnp.float32) + b1_ref[...]
    h = jnp.maximum(h, 0.0)                                     # (T, tk) f32
    acc_ref[...] += jnp.dot(h.astype(x.dtype), w2_ref[...],
                            preferred_element_type=jnp.float32)

    @pl.when(k == pl.num_programs(1) - 1)
    def _():
        z = acc_ref[...] + b2_ref[...] + x.astype(jnp.float32)
        o_ref[...] = _layer_norm(z, g_ref[...], be_ref[...],
                                 eps=eps, d_in=d_in, d_pad=d_pad).astype(o_ref.dtype)


# ---------------------------------------------------------------------------
# Wrapper
# ---------------------------------------------------------------------------
def positionwise_feed_forward(x, w1, b1, w2, b2, gamma, beta, *,
                              eps: float = 1e-5,
                              max_tile_rows: int = 1024,
                              force_hid_tiling: bool = False,
                              max_hid_tile=None):
    """x: (B, S, d_in); w1: (d_hid, d_in[,1]) Conv1d weight; w2: (d_in, d_hid[,1])."""
    B, S, d_in = x.shape
    d_hid = w1.shape[0]
    N = B * S

    sublane = _sublane_multiple(x.dtype)
    itemsize = jnp.dtype(x.dtype).itemsize
    d_pad = _round_up(d_in, 128)          # lane-dense output / aligned MXU tiles
    h_pad = _round_up(d_hid, 128)

    # --- wrapper-side layout plumbing: flatten rows, zero-pad feature dims ----
    xf = x.reshape(N, d_in)
    if d_pad != d_in:
        xf = jnp.pad(xf, ((0, 0), (0, d_pad - d_in)))

    def _pad2(a, r, c):
        return jnp.pad(a, ((0, r - a.shape[0]), (0, c - a.shape[1])))

    w1t = _pad2(jnp.asarray(w1.reshape(d_hid, d_in).T, x.dtype), d_pad, h_pad)  # (d_pad, h_pad)
    w2t = _pad2(jnp.asarray(w2.reshape(d_in, d_hid).T, x.dtype), h_pad, d_pad)  # (h_pad, d_pad)
    b1r = _pad2(jnp.asarray(b1, jnp.float32).reshape(1, d_hid), 1, h_pad)
    b2r = _pad2(jnp.asarray(b2, jnp.float32).reshape(1, d_in), 1, d_pad)
    g_r = _pad2(jnp.asarray(gamma, jnp.float32).reshape(1, d_in), 1, d_pad)
    be_r = _pad2(jnp.asarray(beta, jnp.float32).reshape(1, d_in), 1, d_pad)

    vmem_limit, budget = _vmem_caps()
    weight_bytes = 2 * d_pad * h_pad * itemsize        # single resident copy each
    small_bytes = (h_pad + 3 * d_pad) * 4 * 2          # biases / LN params (+slack)

    def _tile_rows(per_row_bytes, avail_bytes):
        if N <= sublane:
            return N                                   # full-extent block is legal
        cap = max(sublane, (avail_bytes // per_row_bytes) // sublane * sublane)
        target = _round_up(max(1, pl.cdiv(N, 4)), sublane)   # prefer >= 4 grid steps
        return max(sublane, min(max_tile_rows, cap, target))

    # per-row VMEM: x (2 bufs) + out (2 bufs) + f32 h + f32 z/temps
    resident_per_row = 4 * d_pad * itemsize + h_pad * 4 + 3 * d_pad * 4
    resident_fits = (weight_bytes + small_bytes + sublane * resident_per_row) <= budget
    use_resident = resident_fits and not force_hid_tiling

    vmem_whole = pl.BlockSpec(memory_space=pltpu.MemorySpace.VMEM)  # one copy, no pipelining

    if use_resident:
        tile = _tile_rows(resident_per_row, budget - weight_bytes - small_bytes)
        grid = (pl.cdiv(N, tile),)
        out = pl.pallas_call(
            functools.partial(_ffn_kernel_resident, eps=eps, d_in=d_in, d_pad=d_pad),
            out_shape=jax.ShapeDtypeStruct((N, d_pad), x.dtype),
            grid_spec=pltpu.PrefetchScalarGridSpec(
                num_scalar_prefetch=0,
                grid=grid,
                in_specs=[
                    pl.BlockSpec((tile, d_pad), lambda i: (i, 0)),   # x row tile
                    vmem_whole,                                      # W1^T (resident)
                    vmem_whole,                                      # b1
                    vmem_whole,                                      # W2^T (resident)
                    vmem_whole,                                      # b2
                    vmem_whole,                                      # gamma
                    vmem_whole,                                      # beta
                ],
                out_specs=pl.BlockSpec((tile, d_pad), lambda i: (i, 0)),
            ),
            compiler_params=pltpu.CompilerParams(
                dimension_semantics=("parallel",),
                vmem_limit_bytes=vmem_limit,
            ),
        )(xf, w1t, b1r, w2t, b2r, g_r, be_r)
    else:
        # d_hid-tiled fallback: stream (d_pad, tk)/(tk, d_pad) weight slabs and
        # accumulate the second matmul into an f32 VMEM scratch.
        wblk_budget = max(budget // 2, 4 * d_pad * 128 * itemsize)
        tk = max(128, (wblk_budget // (4 * d_pad * itemsize)) // 128 * 128)
        tk = min(tk, h_pad)
        if max_hid_tile is not None:
            tk = max(128, min(tk, (max_hid_tile // 128) * 128))
        while h_pad % tk:                 # tk must evenly divide h_pad
            tk -= 128

        tiled_per_row = 4 * d_pad * itemsize + tk * 4 + 3 * d_pad * 4
        wblk_bytes = 4 * d_pad * tk * itemsize           # 2 weight inputs x 2 buffers
        tile = _tile_rows(tiled_per_row,
                          max(budget - wblk_bytes - small_bytes,
                              sublane * tiled_per_row))
        grid = (pl.cdiv(N, tile), h_pad // tk)
        out = pl.pallas_call(
            functools.partial(_ffn_kernel_hid_tiled, eps=eps, d_in=d_in, d_pad=d_pad),
            out_shape=jax.ShapeDtypeStruct((N, d_pad), x.dtype),
            grid_spec=pltpu.PrefetchScalarGridSpec(
                num_scalar_prefetch=0,
                grid=grid,
                in_specs=[
                    pl.BlockSpec((tile, d_pad), lambda i, k: (i, 0)),  # x (reused across k)
                    pl.BlockSpec((d_pad, tk), lambda i, k: (0, k)),    # W1^T slab
                    pl.BlockSpec((1, tk), lambda i, k: (0, k)),        # b1 slab
                    pl.BlockSpec((tk, d_pad), lambda i, k: (k, 0)),    # W2^T slab
                    vmem_whole,                                        # b2
                    vmem_whole,                                        # gamma
                    vmem_whole,                                        # beta
                ],
                out_specs=pl.BlockSpec((tile, d_pad), lambda i, k: (i, 0)),
                scratch_shapes=[pltpu.VMEM((tile, d_pad), jnp.float32)],
            ),
            compiler_params=pltpu.CompilerParams(
                dimension_semantics=("parallel", "arbitrary"),
                vmem_limit_bytes=vmem_limit,
            ),
        )(xf, w1t, b1r, w2t, b2r, g_r, be_r)

    if d_pad != d_in:
        out = out[:, :d_in]
    return out.reshape(B, S, d_in)


# ---------------------------------------------------------------------------
# Demo / correctness check
# ---------------------------------------------------------------------------
if __name__ == "__main__":
    def ref_forward(x, w1, b1, w2, b2, gamma, beta, eps=1e-5):
        w1m, w2m = w1[..., 0], w2[..., 0]
        h = jnp.maximum(jnp.einsum("bsd,hd->bsh", x, w1m) + b1, 0.0)
        y = jnp.einsum("bsh,dh->bsd", h, w2m) + b2
        z = y + x
        mean = jnp.mean(z, axis=-1, keepdims=True)
        var = jnp.mean(jnp.square(z - mean), axis=-1, keepdims=True)
        return (z - mean) / jnp.sqrt(var + eps) * gamma + beta

    def make_inputs(key, B, S, d_in, d_hid, dtype=jnp.float32):
        kx, k1, k2, k3, k4, k5, k6 = jax.random.split(key, 7)
        x = jax.random.normal(kx, (B, S, d_in), dtype)
        w1 = jax.random.normal(k1, (d_hid, d_in, 1), jnp.float32) / np.sqrt(d_in)
        b1 = 0.1 * jax.random.normal(k2, (d_hid,), jnp.float32)
        w2 = jax.random.normal(k3, (d_in, d_hid, 1), jnp.float32) / np.sqrt(d_hid)
        b2 = 0.1 * jax.random.normal(k4, (d_in,), jnp.float32)
        gamma = 1.0 + 0.1 * jax.random.normal(k5, (d_in,), jnp.float32)
        beta = 0.1 * jax.random.normal(k6, (d_in,), jnp.float32)
        return x, w1, b1, w2, b2, gamma, beta

    key = jax.random.PRNGKey(0)
    k_a, k_b = jax.random.split(key)

    # Case 1: d_in < 128 exercises lane padding + masked LayerNorm; resident path.
    args1 = make_inputs(k_a, 2, 8, 32, 64)
    out1 = jax.block_until_ready(positionwise_feed_forward(*args1))
    ref1 = ref_forward(*args1)
    assert out1.shape == ref1.shape and out1.dtype == args1[0].dtype
    np.testing.assert_allclose(np.asarray(out1), np.asarray(ref1), rtol=1e-4, atol=1e-4)

    # Case 2: lane-aligned d_in, forced d_hid-tiled fallback (3 k-steps) with the
    # f32 accumulator + pl.when init/finalize.
    args2 = make_inputs(k_b, 2, 16, 128, 320)
    out2 = jax.block_until_ready(
        positionwise_feed_forward(*args2, force_hid_tiling=True, max_hid_tile=128))
    ref2 = ref_forward(*args2)
    assert out2.shape == ref2.shape and out2.dtype == args2[0].dtype
    np.testing.assert_allclose(np.asarray(out2), np.asarray(ref2), rtol=1e-4, atol=1e-4)

    print("KERNEL_OK")
</pallas_src>

<mosaic_0001>
module attributes {stable_mosaic.version = 11 : i64} {
  func.func @_ffn_kernel_resident(%arg0: i32, %arg1: memref<8x128xf32, #tpu.memory_space<vmem>>, %arg2: memref<128x128xf32, #tpu.memory_space<vmem>>, %arg3: memref<1x128xf32, #tpu.memory_space<vmem>>, %arg4: memref<128x128xf32, #tpu.memory_space<vmem>>, %arg5: memref<1x128xf32, #tpu.memory_space<vmem>>, %arg6: memref<1x128xf32, #tpu.memory_space<vmem>>, %arg7: memref<1x128xf32, #tpu.memory_space<vmem>>, %arg8: memref<8x128xf32, #tpu.memory_space<vmem>>) attributes {dimension_semantics = [#tpu.dimension_semantics<parallel>], iteration_bounds = array<i64: 2>, scalar_prefetch = 0 : i64, scratch_operands = 0 : i64, tpu.core_type = #tpu.core_type<tc>, window_params = [{transform_indices = @transform_0, window_bounds = array<i64: 8, 128>}, {pipeline_mode = #tpu.pipeline_mode<synchronous>, transform_indices = @transform_1, window_bounds = array<i64: 128, 128>}, {pipeline_mode = #tpu.pipeline_mode<synchronous>, transform_indices = @transform_2, window_bounds = array<i64: 1, 128>}, {pipeline_mode = #tpu.pipeline_mode<synchronous>, transform_indices = @transform_3, window_bounds = array<i64: 128, 128>}, {pipeline_mode = #tpu.pipeline_mode<synchronous>, transform_indices = @transform_4, window_bounds = array<i64: 1, 128>}, {pipeline_mode = #tpu.pipeline_mode<synchronous>, transform_indices = @transform_5, window_bounds = array<i64: 1, 128>}, {pipeline_mode = #tpu.pipeline_mode<synchronous>, transform_indices = @transform_6, window_bounds = array<i64: 1, 128>}, {transform_indices = @transform_7, window_bounds = array<i64: 8, 128>}]} {
    %c0 = arith.constant 0 : index
    %c0_0 = arith.constant 0 : index
    %0 = vector.load %arg1[%c0, %c0_0] : memref<8x128xf32, #tpu.memory_space<vmem>>, vector<8x128xf32>
    %c0_1 = arith.constant 0 : index
    %c0_2 = arith.constant 0 : index
    %1 = vector.load %arg2[%c0_1, %c0_2] : memref<128x128xf32, #tpu.memory_space<vmem>>, vector<128x128xf32>
    %cst = arith.constant dense<0.000000e+00> : vector<8x128xf32>
    %2 = tpu.matmul %0, %1, %cst {dimension_numbers = #tpu.dot_dimension_numbers<[1], [0], [0], [1], [0, 0, 1, 1], [], []>} : vector<8x128xf32>, vector<128x128xf32>, vector<8x128xf32> -> vector<8x128xf32>
    %c0_3 = arith.constant 0 : index
    %c0_4 = arith.constant 0 : index
    %3 = vector.load %arg3[%c0_3, %c0_4] : memref<1x128xf32, #tpu.memory_space<vmem>>, vector<1x128xf32>
    %4 = vector.broadcast %3 : vector<1x128xf32> to vector<8x128xf32>
    %5 = arith.addf %2, %4 : vector<8x128xf32>
    %cst_5 = arith.constant 0.000000e+00 : f32
    %6 = vector.broadcast %cst_5 : f32 to vector<8x128xf32>
    %7 = arith.maximumf %5, %6 : vector<8x128xf32>
    %c0_6 = arith.constant 0 : index
    %c0_7 = arith.constant 0 : index
    %8 = vector.load %arg4[%c0_6, %c0_7] : memref<128x128xf32, #tpu.memory_space<vmem>>, vector<128x128xf32>
    %cst_8 = arith.constant dense<0.000000e+00> : vector<8x128xf32>
    %9 = tpu.matmul %7, %8, %cst_8 {dimension_numbers = #tpu.dot_dimension_numbers<[1], [0], [0], [1], [0, 0, 1, 1], [], []>} : vector<8x128xf32>, vector<128x128xf32>, vector<8x128xf32> -> vector<8x128xf32>
    %c0_9 = arith.constant 0 : index
    %c0_10 = arith.constant 0 : index
    %10 = vector.load %arg5[%c0_9, %c0_10] : memref<1x128xf32, #tpu.memory_space<vmem>>, vector<1x128xf32>
    %11 = vector.broadcast %10 : vector<1x128xf32> to vector<8x128xf32>
    %12 = arith.addf %9, %11 : vector<8x128xf32>
    %13 = arith.addf %12, %0 : vector<8x128xf32>
    %c0_11 = arith.constant 0 : index
    %c0_12 = arith.constant 0 : index
    %14 = vector.load %arg6[%c0_11, %c0_12] : memref<1x128xf32, #tpu.memory_space<vmem>>, vector<1x128xf32>
    %c0_13 = arith.constant 0 : index
    %c0_14 = arith.constant 0 : index
    %15 = vector.load %arg7[%c0_13, %c0_14] : memref<1x128xf32, #tpu.memory_space<vmem>>, vector<1x128xf32>
    %cst_15 = arith.constant dense<0.000000e+00> : vector<8xf32>
    %16 = vector.multi_reduction <add>, %13, %cst_15 [1] : vector<8x128xf32> to vector<8xf32>
    %17 = vector.shape_cast %16 : vector<8xf32> to vector<8x1xf32>
    %cst_16 = arith.constant 3.125000e-02 : f32
    %18 = vector.broadcast %cst_16 : f32 to vector<8x1xf32>
    %19 = arith.mulf %17, %18 : vector<8x1xf32>
    %20 = tpu.iota {dimensions = array<i32: 1>} : vector<8x128xi32>
    %c32_i32 = arith.constant 32 : i32
    %21 = vector.broadcast %c32_i32 : i32 to vector<8x128xi32>
    %22 = arith.cmpi slt, %20, %21 : vector<8x128xi32>
    %23 = vector.broadcast %19 : vector<8x1xf32> to vector<8x128xf32>
    %24 = arith.subf %13, %23 : vector<8x128xf32>
    %cst_17 = arith.constant 0.000000e+00 : f32
    %25 = vector.broadcast %cst_17 : f32 to vector<8x128xf32>
    %26 = arith.select %22, %24, %25 : vector<8x128xi1>, vector<8x128xf32>
    %27 = arith.mulf %26, %26 : vector<8x128xf32>
    %cst_18 = arith.constant dense<0.000000e+00> : vector<8xf32>
    %28 = vector.multi_reduction <add>, %27, %cst_18 [1] : vector<8x128xf32> to vector<8xf32>
    %29 = vector.shape_cast %28 : vector<8xf32> to vector<8x1xf32>
    %cst_19 = arith.constant 3.125000e-02 : f32
    %30 = vector.broadcast %cst_19 : f32 to vector<8x1xf32>
    %31 = arith.mulf %29, %30 : vector<8x1xf32>
    %32 = vector.broadcast %19 : vector<8x1xf32> to vector<8x128xf32>
    %33 = arith.subf %13, %32 : vector<8x128xf32>
    %cst_20 = arith.constant 9.99999974E-6 : f32
    %34 = vector.broadcast %cst_20 : f32 to vector<8x1xf32>
    %35 = arith.addf %31, %34 : vector<8x1xf32>
    %36 = math.rsqrt %35 : vector<8x1xf32>
    %37 = vector.broadcast %36 : vector<8x1xf32> to vector<8x128xf32>
    %38 = arith.mulf %33, %37 : vector<8x128xf32>
    %39 = vector.broadcast %14 : vector<1x128xf32> to vector<8x128xf32>
    %40 = arith.mulf %38, %39 : vector<8x128xf32>
    %41 = vector.broadcast %15 : vector<1x128xf32> to vector<8x128xf32>
    %42 = arith.addf %40, %41 : vector<8x128xf32>
    %c0_21 = arith.constant 0 : index
    %c0_22 = arith.constant 0 : index
    %43 = vector.load %arg8[%c0_21, %c0_22] : memref<8x128xf32, #tpu.memory_space<vmem>>, vector<8x128xf32>
    tpu.vector_store %arg8[%c0_21, %c0_22], %42 {strides = array<i32>} : memref<8x128xf32, #tpu.memory_space<vmem>>, vector<8x128xf32>,
    return
  }
  func.func @transform_0(%arg0: i32) -> (i32, i32) {
    %c0_i32 = arith.constant 0 : i32
    %c0_i32_0 = arith.constant 0 : i32
    return %arg0, %c0_i32 : i32, i32
  }
  func.func @transform_1(%arg0: i32) -> (i32, i32) {
    %c0_i32 = arith.constant 0 : i32
    %c0_i32_0 = arith.constant 0 : i32
    %c0_i32_1 = arith.constant 0 : i32
    return %c0_i32, %c0_i32_0 : i32, i32
  }
  func.func @transform_2(%arg0: i32) -> (i32, i32) {
    %c0_i32 = arith.constant 0 : i32
    %c0_i32_0 = arith.constant 0 : i32
    %c0_i32_1 = arith.constant 0 : i32
    return %c0_i32, %c0_i32_0 : i32, i32
  }
  func.func @transform_3(%arg0: i32) -> (i32, i32) {
    %c0_i32 = arith.constant 0 : i32
    %c0_i32_0 = arith.constant 0 : i32
    %c0_i32_1 = arith.constant 0 : i32
    return %c0_i32, %c0_i32_0 : i32, i32
  }
  func.func @transform_4(%arg0: i32) -> (i32, i32) {
    %c0_i32 = arith.constant 0 : i32
    %c0_i32_0 = arith.constant 0 : i32
    %c0_i32_1 = arith.constant 0 : i32
    return %c0_i32, %c0_i32_0 : i32, i32
  }
  func.func @transform_5(%arg0: i32) -> (i32, i32) {
    %c0_i32 = arith.constant 0 : i32
    %c0_i32_0 = arith.constant 0 : i32
    %c0_i32_1 = arith.constant 0 : i32
    return %c0_i32, %c0_i32_0 : i32, i32
  }
  func.func @transform_6(%arg0: i32) -> (i32, i32) {
    %c0_i32 = arith.constant 0 : i32
    %c0_i32_0 = arith.constant 0 : i32
    %c0_i32_1 = arith.constant 0 : i32
    return %c0_i32, %c0_i32_0 : i32, i32
  }
  func.func @transform_7(%arg0: i32) -> (i32, i32) {
    %c0_i32 = arith.constant 0 : i32
    %c0_i32_0 = arith.constant 0 : i32
    return %arg0, %c0_i32 : i32, i32
  }
}

</mosaic_0001>

<llo_original>
// kernel: tpu_custom_call.1
$region0: #{tpu_custom_call.1}
  #allocation0 [shape = 'u32[]', space=smem, size = 0x4, offset = 0x4, fixed_abs, tag = 'smem constant byte address 0x4 - core index']
  #allocation1 [shape = 'u32[72,128]{1,0:T(1,128)}', space=vmem, size = 0x9000, scoped, tag = 'internal scratch']
  %s0 = inlined_call_operand.hbm [shape: f32[16,128], index: 0, kind: input, shape index: {}]
  %s1 = inlined_call_operand.hbm [shape: f32[128,128], index: 1, kind: input, shape index: {}]
  %s2 = inlined_call_operand.vmem [shape: f32[1,128], index: 2, kind: input, shape index: {}]
  %s3 = inlined_call_operand.hbm [shape: f32[128,128], index: 3, kind: input, shape index: {}]
  %s4 = inlined_call_operand.vmem [shape: f32[1,128], index: 4, kind: input, shape index: {}]
  %s5 = inlined_call_operand.vmem [shape: f32[1,128], index: 5, kind: input, shape index: {}]
  %s6 = inlined_call_operand.vmem [shape: f32[1,128], index: 6, kind: input, shape index: {}]
  %s7 = inlined_call_operand.hbm [shape: f32[16,128], index: 7, kind: output, shape index: {}]
  %s8 = sld [smem:[#allocation0]]
  $region73: #{tpu_custom_call.1} parent=0
    _
  %s10 = ssub.s32 1, %s8
  %s11 = scalar_select 0, %s10, %s8
  $region1: #{tpu_custom_call.1} parent=0
    #allocation2 [shape = 'u8[8192]{0}', space=vmem, size = 0x2000, scoped, tag = 'input window, operand 0']
    #allocation3 [shape = 's32[2]{0}', space=sflag, size = 0x8, scoped, tag = 'scoped memory for tpu_custom_call.1']
    #allocation4 [shape = 's32[2]{0}', space=sflag, size = 0x8, scoped, tag = 'scoped memory for tpu_custom_call.1']
    #allocation5 [shape = 'u8[65536]{0}', space=vmem, size = 0x10000, scoped, tag = 'input window, operand 1, single buffered']
    #allocation6 [shape = 's32[1]{0}', space=sflag, size = 0x4, scoped, tag = 'scoped memory for tpu_custom_call.1']
    #allocation7 [shape = 'u8[65536]{0}', space=vmem, size = 0x10000, scoped, tag = 'input window, operand 3, single buffered']
    #allocation8 [shape = 'u8[8192]{0}', space=vmem, size = 0x2000, scoped, tag = 'output window, operand 0']
    %12 = vsyncpa [#allocation3], 0
    %s13 = scalar_lea.sflag [#allocation3], 1
    %14 = vsyncpa %s13, 0
    %15 = vsyncpa [#allocation6], 0
    %16 = vsyncpa [#allocation4], 0
    %s17 = scalar_lea.sflag [#allocation4], 1
    %18 = vsyncpa %s17, 0
    loop: start=0, step=1, limit=4
    $region2: #{tpu_custom_call.1} parent=1 // loop_pre_header
      _
    $region3: #{tpu_custom_call.1} parent=1 // loop_header
      %s20 = sphi 0, %s24
      %p21 = scmp.ge.s32.totalorder %s20, 4
      %s30 = sphi 0, %s32
      %s33 = sphi 0, %s30
      %s34 = sphi 0, %s33
      %s50 = sphi 0, %s34
      %s54 = sphi 0, %s54
      %s56 = sphi 0, %s54
      %s57 = sphi 0, %s56
      %s71 = sphi 0, %s57
      %s75 = sphi 0, %s75
      %s77 = sphi 0, %s75
      %s78 = sphi 0, %s77
      %s92 = sphi 0, %s78
      %s96 = sphi 0, %s96
      %s98 = sphi 0, %s96
      %s99 = sphi 0, %s98
      %s113 = sphi 0, %s99
      %s117 = sphi 0, %s117
      %s119 = sphi 0, %s117
      %s120 = sphi 0, %s119
      %s134 = sphi 0, %s120
      %s138 = sphi 0, %s138
      %s140 = sphi 0, %s138
      %s141 = sphi 0, %s140
      %s155 = sphi 0, %s141
      %s159 = sphi 0, %s159
      %s161 = sphi 0, %s159
      %s162 = sphi 0, %s161
      %s176 = sphi 0, %s162
      %s182 = sphi 0, %s184
      %s185 = sphi 0, %s182
      %s186 = sphi 0, %s185
      %s202 = sphi 0, %s186
    $region4: #{tpu_custom_call.1} parent=1 // loop_header_branch
      %23 = sbr.rel (%p21) target = $region8
    $region5: #{tpu_custom_call.1} parent=1 // loop_body
      %s25 = ssub.s32 %s20, 1
      %s26 = ssub.s32 %s20, 2
      %s27 = sadd.s32 %s20, 1
      %s28 = ssub.s32 %s20, %s27
      %p29 = scmp.eq.s32.totalorder %s28, 0
      %s31 = sadd.s32 %s30, 1
      %s32 = scalar_select %p29, %s30, %s31
      %p35 = pneg %p29
      %p36 = scmp.eq.s32.totalorder %s20, 1
      %p37 = por %p35, %p36
      %p38 = scmp.ne.s32.totalorder %s30, %s33
      %p39 = scmp.eq.s32.totalorder %s20, 0
      %p40 = por %p38, %p39
      %p41 = scmp.ne.s32.totalorder %s30, %s33
      %p42 = scmp.eq.s32.totalorder %s25, 1
      %p43 = por %p41, %p42
      %p44 = scmp.ne.s32.totalorder %s33, %s34
      %p45 = scmp.eq.s32.totalorder %s25, 0
      %p46 = por %p44, %p45
      %p47 = scmp.ne.s32.totalorder %s33, %s34
      %p48 = scmp.eq.s32.totalorder %s26, 1
      %p49 = por %p47, %p48
      %p51 = scmp.ne.s32.totalorder %s34, %s50
      %p52 = scmp.eq.s32.totalorder %s26, 0
      %p53 = por %p51, %p52
      %s55 = sadd.s32 %s54, 1
      %p58 = scmp.eq.s32.totalorder %s20, 1
      %p59 = scmp.ne.s32.totalorder %s54, %s56
      %p60 = scmp.eq.s32.totalorder %s20, 0
      %p61 = por %p59, %p60
      %p62 = scmp.ne.s32.totalorder %s54, %s56
      %p63 = scmp.eq.s32.totalorder %s25, 1
      %p64 = por %p62, %p63
      %p65 = scmp.ne.s32.totalorder %s56, %s57
      %p66 = scmp.eq.s32.totalorder %s25, 0
      %p67 = por %p65, %p66
      %p68 = scmp.ne.s32.totalorder %s56, %s57
      %p69 = scmp.eq.s32.totalorder %s26, 1
      %p70 = por %p68, %p69
      %p72 = scmp.ne.s32.totalorder %s57, %s71
      %p73 = scmp.eq.s32.totalorder %s26, 0
      %p74 = por %p72, %p73
      %s76 = sadd.s32 %s75, 1
      %p79 = scmp.eq.s32.totalorder %s20, 1
      %p80 = scmp.ne.s32.totalorder %s75, %s77
      %p81 = scmp.eq.s32.totalorder %s20, 0
      %p82 = por %p80, %p81
      %p83 = scmp.ne.s32.totalorder %s75, %s77
      %p84 = scmp.eq.s32.totalorder %s25, 1
      %p85 = por %p83, %p84
      %p86 = scmp.ne.s32.totalorder %s77, %s78
      %p87 = scmp.eq.s32.totalorder %s25, 0
      %p88 = por %p86, %p87
      %p89 = scmp.ne.s32.totalorder %s77, %s78
      %p90 = scmp.eq.s32.totalorder %s26, 1
      %p91 = por %p89, %p90
      %p93 = scmp.ne.s32.totalorder %s78, %s92
      %p94 = scmp.eq.s32.totalorder %s26, 0
      %p95 = por %p93, %p94
      %s97 = sadd.s32 %s96, 1
      %p100 = scmp.eq.s32.totalorder %s20, 1
      %p101 = scmp.ne.s32.totalorder %s96, %s98
      %p102 = scmp.eq.s32.totalorder %s20, 0
      %p103 = por %p101, %p102
      %p104 = scmp.ne.s32.totalorder %s96, %s98
      %p105 = scmp.eq.s32.totalorder %s25, 1
      %p106 = por %p104, %p105
      %p107 = scmp.ne.s32.totalorder %s98, %s99
      %p108 = scmp.eq.s32.totalorder %s25, 0
      %p109 = por %p107, %p108
      %p110 = scmp.ne.s32.totalorder %s98, %s99
      %p111 = scmp.eq.s32.totalorder %s26, 1
      %p112 = por %p110, %p111
      %p114 = scmp.ne.s32.totalorder %s99, %s113
      %p115 = scmp.eq.s32.totalorder %s26, 0
      %p116 = por %p114, %p115
      %s118 = sadd.s32 %s117, 1
      %p121 = scmp.eq.s32.totalorder %s20, 1
      %p122 = scmp.ne.s32.totalorder %s117, %s119
      %p123 = scmp.eq.s32.totalorder %s20, 0
      %p124 = por %p122, %p123
      %p125 = scmp.ne.s32.totalorder %s117, %s119
      %p126 = scmp.eq.s32.totalorder %s25, 1
      %p127 = por %p125, %p126
      %p128 = scmp.ne.s32.totalorder %s119, %s120
      %p129 = scmp.eq.s32.totalorder %s25, 0
      %p130 = por %p128, %p129
      %p131 = scmp.ne.s32.totalorder %s119, %s120
      %p132 = scmp.eq.s32.totalorder %s26, 1
      %p133 = por %p131, %p132
      %p135 = scmp.ne.s32.totalorder %s120, %s134
      %p136 = scmp.eq.s32.totalorder %s26, 0
      %p137 = por %p135, %p136
      %s139 = sadd.s32 %s138, 1
      %p142 = scmp.eq.s32.totalorder %s20, 1
      %p143 = scmp.ne.s32.totalorder %s138, %s140
      %p144 = scmp.eq.s32.totalorder %s20, 0
      %p145 = por %p143, %p144
      %p146 = scmp.ne.s32.totalorder %s138, %s140
      %p147 = scmp.eq.s32.totalorder %s25, 1
      %p148 = por %p146, %p147
      %p149 = scmp.ne.s32.totalorder %s140, %s141
      %p150 = scmp.eq.s32.totalorder %s25, 0
      %p151 = por %p149, %p150
      %p152 = scmp.ne.s32.totalorder %s140, %s141
      %p153 = scmp.eq.s32.totalorder %s26, 1
      %p154 = por %p152, %p153
      %p156 = scmp.ne.s32.totalorder %s141, %s155
      %p157 = scmp.eq.s32.totalorder %s26, 0
      %p158 = por %p156, %p157
      %s160 = sadd.s32 %s159, 1
      %p163 = scmp.eq.s32.totalorder %s20, 1
      %p164 = scmp.ne.s32.totalorder %s159, %s161
      %p165 = scmp.eq.s32.totalorder %s20, 0
      %p166 = por %p164, %p165
      %p167 = scmp.ne.s32.totalorder %s159, %s161
      %p168 = scmp.eq.s32.totalorder %s25, 1
      %p169 = por %p167, %p168
      %p170 = scmp.ne.s32.totalorder %s161, %s162
      %p171 = scmp.eq.s32.totalorder %s25, 0
      %p172 = por %p170, %p171
      %p173 = scmp.ne.s32.totalorder %s161, %s162
      %p174 = scmp.eq.s32.totalorder %s26, 1
      %p175 = por %p173, %p174
      %p177 = scmp.ne.s32.totalorder %s162, %s176
      %p178 = scmp.eq.s32.totalorder %s26, 0
      %p179 = por %p177, %p178
      %s180 = ssub.s32 %s20, %s27
      %p181 = scmp.eq.s32.totalorder %s180, 0
      %s183 = sadd.s32 %s182, 1
      %s184 = scalar_select %p181, %s182, %s183
      %p187 = pneg %p181
      %p188 = scmp.eq.s32.totalorder %s20, 1
      %p189 = por %p187, %p188
      %p190 = scmp.ne.s32.totalorder %s182, %s185
      %p191 = scmp.eq.s32.totalorder %s20, 0
      %p192 = por %p190, %p191
      %p193 = scmp.ne.s32.totalorder %s182, %s185
      %p194 = scmp.eq.s32.totalorder %s25, 1
      %p195 = por %p193, %p194
      %p196 = scmp.ne.s32.totalorder %s185, %s186
      %p197 = scmp.eq.s32.totalorder %s25, 0
      %p198 = por %p196, %p197
      %p199 = scmp.ne.s32.totalorder %s185, %s186
      %p200 = scmp.eq.s32.totalorder %s26, 1
      %p201 = por %p199, %p200
      %p203 = scmp.ne.s32.totalorder %s186, %s202
      %p204 = scmp.eq.s32.totalorder %s26, 0
      %p205 = por %p203, %p204
      %p206 = scmp.le.s32.totalorder 1, %s20
      %p207 = scmp.lt.s32.totalorder %s20, 3
      %p208 = pnand %p206, %p207
      %p209 = pneg %p208
      // Predicated region
      $region9: #{tpu_custom_call.1} parent=5 // pred_check
        _
      $region10: #{tpu_custom_call.1} parent=5 // pred_check_branch
        %211 = sbr.rel (%p208) target = $region12
      $region11: #{tpu_custom_call.1} parent=5 // pred_region
        %s212 = ssub.s32 %s20, 1
        // Predicated region
        $region13: #{tpu_custom_call.1} parent=11 // pred_check
          %p213 = pneg %p67
        $region14: #{tpu_custom_call.1} parent=11 // pred_check_branch
          %215 = sbr.rel (%p213) target = $region16
        $region15: #{tpu_custom_call.1} parent=11 // pred_region
          %217 = vsyncadd [#allocation6], 0
          %s218 = sshll.u32 %s1, 4
          %s219 = int_to_ptr.hbm [resolvable:$true] %s218
          %s220 = sshll.u32 [#allocation5], 4
          %s221 = int_to_ptr.vmem [resolvable:$true] %s220
          %226 = dma.hbm_to_vmem [thread:$0]  %s219, 2048, %s221, [#allocation6], 128, 128, 8
        $region16: #{tpu_custom_call.1} parent=11 // pred_fallthru
          _
        // Predicated region
        $region17: #{tpu_custom_call.1} parent=11 // pred_check
          %p227 = pneg %p88
        $region18: #{tpu_custom_call.1} parent=11 // pred_check_branch
          %229 = sbr.rel (%p227) target = $region20
        $region19: #{tpu_custom_call.1} parent=11 // pred_region
          _
        $region20: #{tpu_custom_call.1} parent=11 // pred_fallthru
          _
        // Predicated region
        $region21: #{tpu_custom_call.1} parent=11 // pred_check
          %p230 = pneg %p109
        $region22: #{tpu_custom_call.1} parent=11 // pred_check_branch
          %232 = sbr.rel (%p230) target = $region24
        $region23: #{tpu_custom_call.1} parent=11 // pred_region
          %234 = vsyncadd [#allocation6], 0
          %s235 = sshll.u32 %s3, 4
          %s236 = int_to_ptr.hbm [resolvable:$true] %s235
          %s237 = sshll.u32 [#allocation7], 4
          %s238 = int_to_ptr.vmem [resolvable:$true] %s237
          %243 = dma.hbm_to_vmem [thread:$0]  %s236, 2048, %s238, [#allocation6], 128, 128, 8
        $region24: #{tpu_custom_call.1} parent=11 // pred_fallthru
          _
        // Predicated region
        $region25: #{tpu_custom_call.1} parent=11 // pred_check
          %p244 = pneg %p130
        $region26: #{tpu_custom_call.1} parent=11 // pred_check_branch
          %246 = sbr.rel (%p244) target = $region28
        $region27: #{tpu_custom_call.1} parent=11 // pred_region
          _
        $region28: #{tpu_custom_call.1} parent=11 // pred_fallthru
          _
        // Predicated region
        $region29: #{tpu_custom_call.1} parent=11 // pred_check
          %p247 = pneg %p151
        $region30: #{tpu_custom_call.1} parent=11 // pred_check_branch
          %249 = sbr.rel (%p247) target = $region32
        $region31: #{tpu_custom_call.1} parent=11 // pred_region
          _
        $region32: #{tpu_custom_call.1} parent=11 // pred_fallthru
          _
        // Predicated region
        $region33: #{tpu_custom_call.1} parent=11 // pred_check
          %p250 = pneg %p172
        $region34: #{tpu_custom_call.1} parent=11 // pred_check_branch
          %252 = sbr.rel (%p250) target = $region36
        $region35: #{tpu_custom_call.1} parent=11 // pred_region
          _
        $region36: #{tpu_custom_call.1} parent=11 // pred_fallthru
          _
      $region12: #{tpu_custom_call.1} parent=5 // pred_fallthru
        _
      %p253 = scmp.lt.s32.totalorder %s20, 2
      // Predicated region
      $region37: #{tpu_custom_call.1} parent=5 // pred_check
        %p254 = pneg %p253
      $region38: #{tpu_custom_call.1} parent=5 // pred_check_branch
        %256 = sbr.rel (%p254) target = $region40
      $region39: #{tpu_custom_call.1} parent=5 // pred_region
        // Predicated region
        $region41: #{tpu_custom_call.1} parent=39 // pred_check
          %p257 = pneg %p40
        $region42: #{tpu_custom_call.1} parent=39 // pred_check_branch
          %259 = sbr.rel (%p257) target = $region44
        $region43: #{tpu_custom_call.1} parent=39 // pred_region
          %s260 = sand.u32 %s30, 1
          %s261 = scalar_lea.sflag [#allocation3], %s260
          %s262 = sand.u32 %s30, 1
          %s263 = smul.addr %s262, 8
          %s264 = scalar_lea.vmem [#allocation2], %s263
          %266 = vsyncadd %s261, 0
          %s267 = smul.addr %s20, 8
          %s268 = scalar_lea.hbm %s0, %s267
          %s270 = sshll.u32 %s268, 4
          %s271 = int_to_ptr.hbm [resolvable:$true] %s270
          %s272 = sshll.u32 %s264, 4
          %s273 = int_to_ptr.vmem [resolvable:$true] %s272
          %275 = dma.hbm_to_vmem [thread:$0]  %s271, 128, %s273, %s261
        $region44: #{tpu_custom_call.1} parent=39 // pred_fallthru
          _
      $region40: #{tpu_custom_call.1} parent=5 // pred_fallthru
        _
      %p276 = scmp.le.s32.totalorder 1, %s20
      %p277 = scmp.lt.s32.totalorder %s20, 3
      %p278 = pnand %p276, %p277
      %p279 = pneg %p278
      // Predicated region
      $region45: #{tpu_custom_call.1} parent=5 // pred_check
        _
      $region46: #{tpu_custom_call.1} parent=5 // pred_check_branch
        %281 = sbr.rel (%p278) target = $region48
      $region47: #{tpu_custom_call.1} parent=5 // pred_region
        %s282 = ssub.s32 %s20, 1
        %s283 = sand.u32 %s33, 1
        %s284 = scalar_lea.sflag [#allocation3], %s283
        %s285 = sand.u32 %s33, 1
        %s286 = smul.addr %s285, 8
        %s287 = scalar_lea.vmem [#allocation2], %s286
        // Predicated region
        $region49: #{tpu_custom_call.1} parent=47 // pred_check
          %p288 = pneg %p46
        $region50: #{tpu_custom_call.1} parent=47 // pred_check_branch
          %290 = sbr.rel (%p288) target = $region52
        $region51: #{tpu_custom_call.1} parent=47 // pred_region
          %292 = dma.done %s284, 128
        $region52: #{tpu_custom_call.1} parent=47 // pred_fallthru
          _
        // Predicated region
        $region53: #{tpu_custom_call.1} parent=47 // pred_check
          %p293 = pneg %p67
        $region54: #{tpu_custom_call.1} parent=47 // pred_check_branch
          %295 = sbr.rel (%p293) target = $region56
        $region55: #{tpu_custom_call.1} parent=47 // pred_region
          %297 = dma.done [#allocation6], 2048
        $region56: #{tpu_custom_call.1} parent=47 // pred_fallthru
          _
        // Predicated region
        $region57: #{tpu_custom_call.1} parent=47 // pred_check
          %p298 = pneg %p109
        $region58: #{tpu_custom_call.1} parent=47 // pred_check_branch
          %300 = sbr.rel (%p298) target = $region60
        $region59: #{tpu_custom_call.1} parent=47 // pred_region
          %302 = dma.done [#allocation6], 2048
        $region60: #{tpu_custom_call.1} parent=47 // pred_fallthru
          _
        %s303 = sand.u32 %s33, 1
        %s304 = scalar_lea.sflag [#allocation3], %s303
        %s305 = sand.u32 %s33, 1
        %s306 = smul.addr %s305, 8
        %s307 = scalar_lea.vmem [#allocation2], %s306
        %p308 = pneg %p46
        %p309 = pneg %p43
        %p310 = pneg %p67
        %p311 = pneg %p64
        %p312 = pneg %p88
        %p313 = pneg %p85
        %p314 = pneg %p109
        %p315 = pneg %p106
        %p316 = pneg %p130
        %p317 = pneg %p127
        %p318 = pneg %p151
        %p319 = pneg %p148
        %p320 = pneg %p172
        %p321 = pneg %p169
        %p322 = pneg %p198
        %p323 = pneg %p195
        %s324 = sand.u32 %s185, 1
        %s325 = scalar_lea.sflag [#allocation4], %s324
        %s326 = sand.u32 %s185, 1
        %s327 = smul.addr %s326, 8
        %s328 = scalar_lea.vmem [#allocation8], %s327
        %v329 = vld [vmem:[%s287] sm:$0xff]
        %v330 = vld [vmem:[#allocation5] sm:$0xff]
        %v331 = vld [vmem:[#allocation5 + $0x8] sm:$0xff]
        %v332 = vld [vmem:[#allocation5 + $0x10] sm:$0xff]
        %v333 = vld [vmem:[#allocation5 + $0x18] sm:$0xff]
        %v334 = vld [vmem:[#allocation5 + $0x20] sm:$0xff]
        %v335 = vld [vmem:[#allocation5 + $0x28] sm:$0xff]
        %v336 = vld [vmem:[#allocation5 + $0x30] sm:$0xff]
        %v337 = vld [vmem:[#allocation5 + $0x38] sm:$0xff]
        %v338 = vld [vmem:[#allocation5 + $0x40] sm:$0xff]
        %v339 = vld [vmem:[#allocation5 + $0x48] sm:$0xff]
        %v340 = vld [vmem:[#allocation5 + $0x50] sm:$0xff]
        %v341 = vld [vmem:[#allocation5 + $0x58] sm:$0xff]
        %v342 = vld [vmem:[#allocation5 + $0x60] sm:$0xff]
        %v343 = vld [vmem:[#allocation5 + $0x68] sm:$0xff]
        %v344 = vld [vmem:[#allocation5 + $0x70] sm:$0xff]
        %v345 = vld [vmem:[#allocation5 + $0x78] sm:$0xff]
        %v346 = vld [vmem:[%s2] sm:$0x1]
        %v348 = vperm.slane %v346, 0
        %350 = vmatpush.msra.mxu0 %v345
        %351 = vmatpush.msra.mxu0 %v344
        %352 = vmatpush.msra.mxu0 %v343
        %353 = vmatpush.msra.mxu0 %v342
        %354 = vmatpush.msra.mxu0 %v341
        %355 = vmatpush.msra.mxu0 %v340
        %356 = vmatpush.msra.mxu0 %v339
        %357 = vmatpush.msra.mxu0 %v338
        %358 = vmatpush.msra.mxu0 %v337
        %359 = vmatpush.msra.mxu0 %v336
        %360 = vmatpush.msra.mxu0 %v335
        %361 = vmatpush.msra.mxu0 %v334
        %362 = vmatpush.msra.mxu0 %v333
        %363 = vmatpush.msra.mxu0 %v332
        %364 = vmatpush.msra.mxu0 %v331
        %365 = vmatpush.msra.mxu0 %v330
        %366 = vmatmul.f32.gmra.mxu0 %v329
        %v367 = vpop.f32.mrf.mxu0
        %v368 = vadd.f32 %v348, %v367
        %369 = vdwg.mxu0
        %v370 = vmax.f32 %v368, 0.0
        %v371 = vld [vmem:[#allocation7] sm:$0xff]
        %v372 = vld [vmem:[#allocation7 + $0x8] sm:$0xff]
        %v373 = vld [vmem:[#allocation7 + $0x10] sm:$0xff]
        %v374 = vld [vmem:[#allocation7 + $0x18] sm:$0xff]
        %v375 = vld [vmem:[#allocation7 + $0x20] sm:$0xff]
        %v376 = vld [vmem:[#allocation7 + $0x28] sm:$0xff]
        %v377 = vld [vmem:[#allocation7 + $0x30] sm:$0xff]
        %v378 = vld [vmem:[#allocation7 + $0x38] sm:$0xff]
        %v379 = vld [vmem:[#allocation7 + $0x40] sm:$0xff]
        %v380 = vld [vmem:[#allocation7 + $0x48] sm:$0xff]
        %v381 = vld [vmem:[#allocation7 + $0x50] sm:$0xff]
        %v382 = vld [vmem:[#allocation7 + $0x58] sm:$0xff]
        %v383 = vld [vmem:[#allocation7 + $0x60] sm:$0xff]
        %v384 = vld [vmem:[#allocation7 + $0x68] sm:$0xff]
        %v385 = vld [vmem:[#allocation7 + $0x70] sm:$0xff]
        %v386 = vld [vmem:[#allocation7 + $0x78] sm:$0xff]
        %v387 = vld [vmem:[%s4] sm:$0x1]
        %v389 = vperm.slane %v387, 0
        %391 = vmatpush.msra.mxu0 %v386
        %392 = vmatpush.msra.mxu0 %v385
        %393 = vmatpush.msra.mxu0 %v384
        %394 = vmatpush.msra.mxu0 %v383
        %395 = vmatpush.msra.mxu0 %v382
        %396 = vmatpush.msra.mxu0 %v381
        %397 = vmatpush.msra.mxu0 %v380
        %398 = vmatpush.msra.mxu0 %v379
        %399 = vmatpush.msra.mxu0 %v378
        %400 = vmatpush.msra.mxu0 %v377
        %401 = vmatpush.msra.mxu0 %v376
        %402 = vmatpush.msra.mxu0 %v375
        %403 = vmatpush.msra.mxu0 %v374
        %404 = vmatpush.msra.mxu0 %v373
        %405 = vmatpush.msra.mxu0 %v372
        %406 = vmatpush.msra.mxu0 %v371
        %407 = vmatmul.f32.gmra.mxu0 %v370
        %v408 = vpop.f32.mrf.mxu0
        %v409 = vadd.f32 %v389, %v408
        %410 = vdwg.mxu0
        %v411 = vadd.f32 %v409, %v329
        %v412 = vld [vmem:[%s5] sm:$0x1]
        %v413 = vld [vmem:[%s6] sm:$0x1]
        %414 = vadd.xlane.f32.xlu0 %v411
        %v415 = vpop.xlane.xlu0 %414
        %v416 = vmul.f32 %v415, 0.03125
        %v417 = vlaneseq
        %v418 = vand.u32 %v417, 127
        %vm419 = vcmp.lt.s32.totalorder %v418, 32
        %v420 = vsub.f32 %v411, %v416
        %v421 = vsel %vm419, %v420, 0.0
        %v422 = vmul.f32 %v421, %v421
        %423 = vadd.xlane.f32.xlu0 %v422
        %v424 = vpop.xlane.xlu0 %423
        %v425 = vmul.f32 %v424, 0.03125
        %v426 = vadd.f32 %v425, 1e-05
        %v427 = vrsqrt.pop %v426
        %v428 = vmul.f32 %v427, %v426
        %v429 = vmul.f32 %v428, %v427
        %v430 = vmul.f32 0.5, %v429
        %v431 = vsub.f32 1.5, %v430
        %v432 = vmul.f32 %v427, %v431
        %vm433 = vweird.f32 %v426
        %vm434 = vweird.f32 %v427
        %vm435 = vmor %vm433, %vm434
        %v436 = vsel %vm435, %v427, %v432
        %v437 = vmul.f32 %v420, %v436
        %v439 = vperm.slane %v412, 0
        %v441 = vmul.f32 %v437, %v439
        %v443 = vperm.slane %v413, 0
        %v445 = vadd.f32 %v441, %v443
        %446 = vst [vmem:[%s328] sm:$0xff] %v445
        %s447 = sand.u32 %s185, 1
        %s448 = scalar_lea.sflag [#allocation4], %s447
        %s449 = sand.u32 %s185, 1
        %s450 = smul.addr %s449, 8
        %s451 = scalar_lea.vmem [#allocation8], %s450
        // Predicated region
        $region61: #{tpu_custom_call.1} parent=47 // pred_check
          %p452 = pneg %p195
        $region62: #{tpu_custom_call.1} parent=47 // pred_check_branch
          %454 = sbr.rel (%p452) target = $region64
        $region63: #{tpu_custom_call.1} parent=47 // pred_region
          %456 = vsyncadd %s448, 0
          %s457 = smul.addr %s25, 8
          %s458 = scalar_lea.hbm %s7, %s457
          %s460 = sshll.u32 %s451, 4
          %s461 = int_to_ptr.vmem [resolvable:$true] %s460
          %s462 = sshll.u32 %s458, 4
          %s463 = int_to_ptr.hbm [resolvable:$true] %s462
          %465 = dma.vmem_to_hbm [thread:$0]  %s461, 128, %s463, %s448
        $region64: #{tpu_custom_call.1} parent=47 // pred_fallthru
          _
      $region48: #{tpu_custom_call.1} parent=5 // pred_fallthru
        _
      %p466 = scmp.le.s32.totalorder 2, %s20
      // Predicated region
      $region65: #{tpu_custom_call.1} parent=5 // pred_check
        %p467 = pneg %p466
      $region66: #{tpu_custom_call.1} parent=5 // pred_check_branch
        %469 = sbr.rel (%p467) target = $region68
      $region67: #{tpu_custom_call.1} parent=5 // pred_region
        %s470 = ssub.s32 %s20, 2
        // Predicated region
        $region69: #{tpu_custom_call.1} parent=67 // pred_check
          %p471 = pneg %p201
        $region70: #{tpu_custom_call.1} parent=67 // pred_check_branch
          %473 = sbr.rel (%p471) target = $region72
        $region71: #{tpu_custom_call.1} parent=67 // pred_region
          %s474 = sand.u32 %s186, 1
          %s475 = scalar_lea.sflag [#allocation4], %s474
          %s476 = sand.u32 %s186, 1
          %s477 = smul.addr %s476, 8
          %s478 = scalar_lea.vmem [#allocation8], %s477
          %480 = dma.done %s475, 128
        $region72: #{tpu_custom_call.1} parent=67 // pred_fallthru
          _
      $region68: #{tpu_custom_call.1} parent=5 // pred_fallthru
        _
    $region6: #{tpu_custom_call.1} parent=1 // loop_footer
      %s24 = sadd.s32 1, %s20
    $region7: #{tpu_custom_call.1} parent=1 // loop_footer_branch
      %19 = sbr.rel target = $region3
    $region8: #{tpu_custom_call.1} parent=1 // loop_exit
      _
    %481 = vsyncpa [#allocation3], 1
    %s482 = scalar_lea.sflag [#allocation3], 1
    %483 = vsyncpa %s482, 1
    %484 = vsyncpa [#allocation6], 1
    %485 = vsyncpa [#allocation4], 1
    %s486 = scalar_lea.sflag [#allocation4], 1
    %487 = vsyncpa %s486, 1

</llo_original>
